<compile_context>
chip_gen: v5e
topology: v5e:2x2
jax: 0.10.0
libtpu: 0.0.40
codegen_flags: <defaults>
</compile_context>

<pallas_src>
import math

import jax
import jax.numpy as jnp
from jax.experimental import pallas as pl
from jax.experimental.pallas import tpu as pltpu

_EPS = 1e-12  # F.normalize default eps


def _round_up(x, m):
    return ((x + m - 1) // m) * m


_VMEM_LIMIT_CACHE = None


def _vmem_limit_bytes():
    """Per-generation scoped-VMEM limit: ~3/4 of physical capacity."""
    global _VMEM_LIMIT_CACHE
    if _VMEM_LIMIT_CACHE is None:
        try:
            cap = int(pltpu.get_tpu_info().vmem_capacity_bytes)
        except Exception:
            cap = 64 * 1024 * 1024  # conservative fallback (v7x-sized VMEM)
        _VMEM_LIMIT_CACHE = int(min(100 * 1024 * 1024, (cap * 3) // 4))
    return _VMEM_LIMIT_CACHE


# ---------------------------------------------------------------------------
# Kernel: tiled (B,K)@(K,N) with fused inv-norm column scale + bias epilogue.
# grid = (B/tm, Out/tn, In/tk); K (reduction) is the last, "arbitrary" axis.
# ---------------------------------------------------------------------------
def _norm_linear_kernel(x_ref, wt_ref, sb_ref, o_ref, acc_ref):
    # x_ref: (tm, tk)  wt_ref: (tk, tn)   -- compute dtype (bf16 or f32)
    # sb_ref: (2, tn) f32 -- row 0 = 1/max(||w_row||, eps), row 1 = bias
    # acc_ref: (tm, tn) f32 VMEM scratch, persists across the K axis.
    k = pl.program_id(2)
    prod = jnp.dot(x_ref[...], wt_ref[...], preferred_element_type=jnp.float32)

    @pl.when(k == 0)
    def _():  # first K step writes directly: no (tm,tn) zero store + RMW
        acc_ref[...] = prod

    @pl.when(k != 0)
    def _():
        acc_ref[...] += prod

    @pl.when(k == pl.num_programs(2) - 1)
    def _():  # fused epilogue in f32, lane-dense store
        sb = sb_ref[...]
        o_ref[...] = (acc_ref[...] * sb[0:1, :] + sb[1:2, :]).astype(o_ref.dtype)


def make_norm_linear(weight, bias=None, *, tm=512, tn=512, tk=1024,
                     compute_dtype=jnp.bfloat16):
    """One-time weight preparation; returns apply(x) -> (B, Out).

    weight: (Out, In), bias: (Out,) or None.  The transpose/pad/inv-norm work
    is done once here and cached in the closure (hoisted out of the hot path).
    """
    Out, In = weight.shape
    compute_dtype = jnp.dtype(compute_dtype)
    sub = 32 // compute_dtype.itemsize  # sublane granularity: 8 f32 / 16 bf16

    # ---- tile sizes for the N / K axes (clamped, 128-aligned) -------------
    tn = _round_up(min(tn, _round_up(Out, 128)), 128)
    tk = _round_up(min(tk, _round_up(In, 128)), 128)
    Outp = _round_up(Out, tn)
    Inp = _round_up(In, tk)
    # v7x megacore: if all of Out fits one tile, split it so the "parallel"
    # j axis has >=2 tiles (keeps both TensorCores busy for small-batch shapes).
    if Outp // tn == 1 and tn % 256 == 0:
        tn //= 2

    # ---- one-time weight prep (cache-friendly: do NOT repeat per call) ----
    w32 = weight.astype(jnp.float32)
    # F.normalize(dim=1): v / max(||v||, eps)  ==  v * rsqrt(max(||v||^2, eps^2))
    inv_norm = jax.lax.rsqrt(jnp.maximum(jnp.sum(w32 * w32, axis=1), _EPS * _EPS))
    b32 = jnp.zeros((Out,), jnp.float32) if bias is None else bias.astype(jnp.float32)
    # Fused (2, Outp) operand {inv_norm, bias}; padded columns get 0 / 0.
    scale_bias = jnp.pad(jnp.stack([inv_norm, b32], axis=0),
                         ((0, 0), (0, Outp - Out)))
    # W pre-transposed to (In, Out): MXU-natural layout, lane-dense output dim.
    wtp = jnp.pad(jnp.transpose(w32),
                  ((0, Inp - In), (0, Outp - Out))).astype(compute_dtype)

    vmem_limit = _vmem_limit_bytes()

    def apply(x):
        B, In_x = x.shape
        assert In_x == In, f"expected In={In}, got {In_x}"
        out_dtype = x.dtype

        tm_ = _round_up(max(sub, min(tm, _round_up(B, sub))), sub)
        Bp = _round_up(B, tm_)
        xp = jnp.pad(x.astype(compute_dtype), ((0, Bp - B), (0, Inp - In)))

        outp = pl.pallas_call(
            _norm_linear_kernel,
            out_shape=jax.ShapeDtypeStruct((Bp, Outp), out_dtype),
            grid_spec=pltpu.PrefetchScalarGridSpec(
                num_scalar_prefetch=0,
                grid=(Bp // tm_, Outp // tn, Inp // tk),
                in_specs=[
                    pl.BlockSpec((tm_, tk), lambda i, j, k: (i, k)),  # x tile
                    pl.BlockSpec((tk, tn), lambda i, j, k: (k, j)),   # W^T tile
                    pl.BlockSpec((2, tn), lambda i, j, k: (0, j)),    # {scale,bias}
                ],
                out_specs=pl.BlockSpec((tm_, tn), lambda i, j, k: (i, j)),
                scratch_shapes=[pltpu.VMEM((tm_, tn), jnp.float32)],
            ),
            compiler_params=pltpu.CompilerParams(
                dimension_semantics=("parallel", "parallel", "arbitrary"),
                vmem_limit_bytes=vmem_limit),
        )(xp, wtp, scale_bias)

        return outp[:B, :Out]

    return apply


def norm_linear(x, weight, bias=None, *, tm=512, tn=512, tk=1024,
                compute_dtype=jnp.bfloat16):
    """Convenience wrapper.  For repeated calls, use make_norm_linear()."""
    return make_norm_linear(weight, bias, tm=tm, tn=tn, tk=tk,
                            compute_dtype=compute_dtype)(x)


def init_params(key, in_features, out_features):
    """Deterministic init mirroring NormLinear.reset_parameters()."""
    kw, kb = jax.random.split(key)
    fan_in = in_features
    w_bound = math.sqrt(6.0 / ((1.0 + 5.0) * fan_in))  # kaiming_uniform_, a=sqrt(5)
    weight = jax.random.uniform(kw, (out_features, in_features), jnp.float32,
                                minval=-w_bound, maxval=w_bound)
    b_bound = 1.0 / math.sqrt(fan_in)
    bias = jax.random.uniform(kb, (out_features,), jnp.float32,
                              minval=-b_bound, maxval=b_bound)
    return weight, bias


def _reference(x, weight, bias):
    w_n = weight / jnp.maximum(
        jnp.sqrt(jnp.sum(weight * weight, axis=1, keepdims=True)), _EPS)
    return x @ w_n.T + bias


if __name__ == "__main__":
    key = jax.random.PRNGKey(0)
    kx, kp, kx2, kp2 = jax.random.split(key, 4)

    # 1) Classifier-style small shape, strict f32 compute path, tight check.
    batch, in_features, out_features = 8, 32, 16
    x = jax.random.normal(kx, (batch, in_features), jnp.float32)
    weight, bias = init_params(kp, in_features, out_features)

    out = norm_linear(x, weight, bias, compute_dtype=jnp.float32)
    jax.block_until_ready(out)
    ref = _reference(x, weight, bias)
    assert out.shape == (batch, out_features)
    assert jnp.allclose(out, ref, atol=1e-5, rtol=1e-5), \
        f"max abs err {jnp.max(jnp.abs(out - ref))}"

    # 2) Multi-tile grid + K accumulation + padding, default bf16 MXU path,
    #    weight-prep hoisted once via make_norm_linear.
    b2, in2, out2 = 16, 384, 256
    x2 = jax.random.normal(kx2, (b2, in2), jnp.float32)
    w2, bias2 = init_params(kp2, in2, out2)

    apply2 = make_norm_linear(w2, bias2, tm=16, tn=128, tk=128)  # bf16 compute
    out_2 = apply2(x2)
    jax.block_until_ready(out_2)
    ref2 = _reference(x2, w2, bias2)
    assert out_2.shape == (b2, out2)
    # bf16 operands (f32 accumulation): compare against the f32 reference with
    # a tolerance that covers bf16 input rounding.
    assert jnp.allclose(out_2, ref2, atol=2e-2, rtol=2e-2), \
        f"max abs err {jnp.max(jnp.abs(out_2 - ref2))}"

    print("KERNEL_OK")
</pallas_src>

<mosaic_0001>
module attributes {stable_mosaic.version = 11 : i64} {
  func.func @_norm_linear_kernel(%arg0: i32, %arg1: i32, %arg2: i32, %arg3: memref<8x128xf32, #tpu.memory_space<vmem>>, %arg4: memref<128x128xf32, #tpu.memory_space<vmem>>, %arg5: memref<2x128xf32, #tpu.memory_space<vmem>>, %arg6: memref<8x128xf32, #tpu.memory_space<vmem>>, %arg7: memref<8x128xf32, #tpu.memory_space<vmem>>) attributes {dimension_semantics = [#tpu.dimension_semantics<parallel>, #tpu.dimension_semantics<parallel>, #tpu.dimension_semantics<arbitrary>], iteration_bounds = array<i64: 1, 1, 1>, scalar_prefetch = 0 : i64, scratch_operands = 1 : i64, tpu.core_type = #tpu.core_type<tc>, window_params = [{transform_indices = @transform_0, window_bounds = array<i64: 8, 128>}, {transform_indices = @transform_1, window_bounds = array<i64: 128, 128>}, {transform_indices = @transform_2, window_bounds = array<i64: 2, 128>}, {transform_indices = @transform_3, window_bounds = array<i64: 8, 128>}]} {
    %c0 = arith.constant 0 : index
    %c0_0 = arith.constant 0 : index
    %0 = vector.load %arg3[%c0, %c0_0] : memref<8x128xf32, #tpu.memory_space<vmem>>, vector<8x128xf32>
    %c0_1 = arith.constant 0 : index
    %c0_2 = arith.constant 0 : index
    %1 = vector.load %arg4[%c0_1, %c0_2] : memref<128x128xf32, #tpu.memory_space<vmem>>, vector<128x128xf32>
    %cst = arith.constant dense<0.000000e+00> : vector<8x128xf32>
    %2 = tpu.matmul %0, %1, %cst {dimension_numbers = #tpu.dot_dimension_numbers<[1], [0], [0], [1], [0, 0, 1, 1], [], []>} : vector<8x128xf32>, vector<128x128xf32>, vector<8x128xf32> -> vector<8x128xf32>
    %c0_i32 = arith.constant 0 : i32
    %3 = arith.cmpi eq, %arg2, %c0_i32 : i32
    %4 = arith.extui %3 : i1 to i32
    %c0_i32_3 = arith.constant 0 : i32
    %5 = arith.cmpi ne, %4, %c0_i32_3 : i32
    scf.if %5 {
      %c0_8 = arith.constant 0 : index
      %c0_9 = arith.constant 0 : index
      %12 = vector.load %arg7[%c0_8, %c0_9] : memref<8x128xf32, #tpu.memory_space<vmem>>, vector<8x128xf32>
      tpu.vector_store %arg7[%c0_8, %c0_9], %2 {strides = array<i32>} : memref<8x128xf32, #tpu.memory_space<vmem>>, vector<8x128xf32>,
    } else {
    }
    %c0_i32_4 = arith.constant 0 : i32
    %6 = arith.cmpi ne, %arg2, %c0_i32_4 : i32
    %7 = arith.extui %6 : i1 to i32
    %c0_i32_5 = arith.constant 0 : i32
    %8 = arith.cmpi ne, %7, %c0_i32_5 : i32
    scf.if %8 {
      %c0_8 = arith.constant 0 : index
      %c0_9 = arith.constant 0 : index
      %12 = vector.load %arg7[%c0_8, %c0_9] : memref<8x128xf32, #tpu.memory_space<vmem>>, vector<8x128xf32>
      %13 = arith.addf %12, %2 : vector<8x128xf32>
      %c0_10 = arith.constant 0 : index
      %c0_11 = arith.constant 0 : index
      %14 = vector.load %arg7[%c0_10, %c0_11] : memref<8x128xf32, #tpu.memory_space<vmem>>, vector<8x128xf32>
      tpu.vector_store %arg7[%c0_10, %c0_11], %13 {strides = array<i32>} : memref<8x128xf32, #tpu.memory_space<vmem>>, vector<8x128xf32>,
    } else {
    }
    %c0_i32_6 = arith.constant 0 : i32
    %9 = arith.cmpi eq, %arg2, %c0_i32_6 : i32
    %10 = arith.extui %9 : i1 to i32
    %c0_i32_7 = arith.constant 0 : i32
    %11 = arith.cmpi ne, %10, %c0_i32_7 : i32
    scf.if %11 {
      %c0_8 = arith.constant 0 : index
      %c0_9 = arith.constant 0 : index
      %12 = vector.load %arg5[%c0_8, %c0_9] : memref<2x128xf32, #tpu.memory_space<vmem>>, vector<2x128xf32>
      %c0_10 = arith.constant 0 : index
      %c0_11 = arith.constant 0 : index
      %13 = vector.load %arg7[%c0_10, %c0_11] : memref<8x128xf32, #tpu.memory_space<vmem>>, vector<8x128xf32>
      %14 = vector.extract_strided_slice %12 {offsets = [0, 0], sizes = [1, 128], strides = [1, 1]} : vector<2x128xf32> to vector<1x128xf32>
      %15 = vector.broadcast %14 : vector<1x128xf32> to vector<8x128xf32>
      %16 = arith.mulf %13, %15 : vector<8x128xf32>
      %17 = vector.extract_strided_slice %12 {offsets = [1, 0], sizes = [1, 128], strides = [1, 1]} : vector<2x128xf32> to vector<1x128xf32>
      %18 = vector.broadcast %17 : vector<1x128xf32> to vector<8x128xf32>
      %19 = arith.addf %16, %18 : vector<8x128xf32>
      %c0_12 = arith.constant 0 : index
      %c0_13 = arith.constant 0 : index
      %20 = vector.load %arg6[%c0_12, %c0_13] : memref<8x128xf32, #tpu.memory_space<vmem>>, vector<8x128xf32>
      tpu.vector_store %arg6[%c0_12, %c0_13], %19 {strides = array<i32>} : memref<8x128xf32, #tpu.memory_space<vmem>>, vector<8x128xf32>,
    } else {
    }
    return
  }
  func.func @transform_0(%arg0: i32, %arg1: i32, %arg2: i32) -> (i32, i32) {
    %c0_i32 = arith.constant 0 : i32
    return %arg0, %arg2 : i32, i32
  }
  func.func @transform_1(%arg0: i32, %arg1: i32, %arg2: i32) -> (i32, i32) {
    %c0_i32 = arith.constant 0 : i32
    return %arg2, %arg1 : i32, i32
  }
  func.func @transform_2(%arg0: i32, %arg1: i32, %arg2: i32) -> (i32, i32) {
    %c0_i32 = arith.constant 0 : i32
    %c0_i32_0 = arith.constant 0 : i32
    return %c0_i32, %arg1 : i32, i32
  }
  func.func @transform_3(%arg0: i32, %arg1: i32, %arg2: i32) -> (i32, i32) {
    %c0_i32 = arith.constant 0 : i32
    return %arg0, %arg1 : i32, i32
  }
}

</mosaic_0001>

<llo_original>
// kernel: tpu_custom_call.1
$region0: #{tpu_custom_call.1}
  #allocation0 [shape = 'u32[]', space=smem, size = 0x4, offset = 0x4, fixed_abs, tag = 'smem constant byte address 0x4 - core index']
  #allocation1 [shape = 'u32[72,128]{1,0:T(1,128)}', space=vmem, size = 0x9000, scoped, tag = 'internal scratch']
  #allocation2 [shape = 'f32[8,128]{1,0:T(8,128)}', space=vmem, size = 0x1000, scoped, tag = 'scratch operand']
  %s0 = inlined_call_operand.hbm [shape: f32[8,128], index: 0, kind: input, shape index: {}]
  %s1 = inlined_call_operand.hbm [shape: f32[128,128], index: 1, kind: input, shape index: {}]
  %s2 = inlined_call_operand.hbm [shape: f32[2,128], index: 2, kind: input, shape index: {}]
  %s3 = inlined_call_operand.hbm [shape: f32[8,128], index: 3, kind: output, shape index: {}]
  %s4 = sld [smem:[#allocation0]]
  $region46: #{tpu_custom_call.1} parent=0
    _
  %s6 = ssub.s32 1, %s4
  %s7 = scalar_select 0, %s6, %s4
  $region1: #{tpu_custom_call.1} parent=0
    #allocation3 [shape = 'u8[4096]{0}', space=vmem, size = 0x1000, scoped, tag = 'input window, operand 0, single buffered']
    #allocation4 [shape = 's32[1]{0}', space=sflag, size = 0x4, scoped, tag = 'scoped memory for tpu_custom_call.1']
    #allocation5 [shape = 's32[1]{0}', space=sflag, size = 0x4, scoped, tag = 'scoped memory for tpu_custom_call.1']
    #allocation6 [shape = 'u8[65536]{0}', space=vmem, size = 0x10000, scoped, tag = 'input window, operand 1, single buffered']
    #allocation7 [shape = 's32[1]{0}', space=sflag, size = 0x4, scoped, tag = 'scoped memory for tpu_custom_call.1']
    #allocation8 [shape = 'u8[1024]{0}', space=vmem, size = 0x400, scoped, tag = 'input window, operand 2, single buffered']
    #allocation9 [shape = 'u8[4096]{0}', space=vmem, size = 0x1000, scoped, tag = 'output window, operand 0, single buffered']
    %8 = vsyncpa [#allocation4], 0
    %9 = vsyncpa [#allocation7], 0
    %10 = vsyncpa [#allocation5], 0
    // Predicated region
    $region2: #{tpu_custom_call.1} parent=1 // pred_check
      _
    $region3: #{tpu_custom_call.1} parent=1 // pred_check_branch
      %12 = sbr.rel (0) target = $region5
    $region4: #{tpu_custom_call.1} parent=1 // pred_region
      %14 = vsyncadd [#allocation4], 0
      %s16 = sshll.u32 %s0, 4
      %s17 = int_to_ptr.hbm [resolvable:$true] %s16
      %s18 = sshll.u32 [#allocation3], 4
      %s19 = int_to_ptr.vmem [resolvable:$true] %s18
      %21 = dma.hbm_to_vmem [thread:$0]  %s17, 128, %s19, [#allocation4]
    $region5: #{tpu_custom_call.1} parent=1 // pred_fallthru
      _
    // Predicated region
    $region6: #{tpu_custom_call.1} parent=1 // pred_check
      _
    $region7: #{tpu_custom_call.1} parent=1 // pred_check_branch
      %23 = sbr.rel (0) target = $region9
    $region8: #{tpu_custom_call.1} parent=1 // pred_region
      %25 = vsyncadd [#allocation7], 0
      %s26 = sshll.u32 %s1, 4
      %s27 = int_to_ptr.hbm [resolvable:$true] %s26
      %s28 = sshll.u32 [#allocation6], 4
      %s29 = int_to_ptr.vmem [resolvable:$true] %s28
      %34 = dma.hbm_to_vmem [thread:$0]  %s27, 2048, %s29, [#allocation7], 128, 128, 8
    $region9: #{tpu_custom_call.1} parent=1 // pred_fallthru
      _
    // Predicated region
    $region10: #{tpu_custom_call.1} parent=1 // pred_check
      _
    $region11: #{tpu_custom_call.1} parent=1 // pred_check_branch
      %36 = sbr.rel (0) target = $region13
    $region12: #{tpu_custom_call.1} parent=1 // pred_region
      %38 = vsyncadd [#allocation7], 0
      %s40 = sshll.u32 %s2, 4
      %s41 = int_to_ptr.hbm [resolvable:$true] %s40
      %s42 = sshll.u32 [#allocation8], 4
      %s43 = int_to_ptr.vmem [resolvable:$true] %s42
      %45 = dma.hbm_to_vmem [thread:$0]  %s41, 32, %s43, [#allocation7]
    $region13: #{tpu_custom_call.1} parent=1 // pred_fallthru
      _
    // Predicated region
    $region14: #{tpu_custom_call.1} parent=1 // pred_check
      _
    $region15: #{tpu_custom_call.1} parent=1 // pred_check_branch
      %47 = sbr.rel (0) target = $region17
    $region16: #{tpu_custom_call.1} parent=1 // pred_region
      %49 = dma.done [#allocation4], 128
    $region17: #{tpu_custom_call.1} parent=1 // pred_fallthru
      _
    // Predicated region
    $region18: #{tpu_custom_call.1} parent=1 // pred_check
      _
    $region19: #{tpu_custom_call.1} parent=1 // pred_check_branch
      %51 = sbr.rel (0) target = $region21
    $region20: #{tpu_custom_call.1} parent=1 // pred_region
      %53 = dma.done [#allocation7], 2048
    $region21: #{tpu_custom_call.1} parent=1 // pred_fallthru
      _
    // Predicated region
    $region22: #{tpu_custom_call.1} parent=1 // pred_check
      _
    $region23: #{tpu_custom_call.1} parent=1 // pred_check_branch
      %55 = sbr.rel (0) target = $region25
    $region24: #{tpu_custom_call.1} parent=1 // pred_region
      %57 = dma.done [#allocation7], 32
    $region25: #{tpu_custom_call.1} parent=1 // pred_fallthru
      _
    %v58 = vld [vmem:[#allocation3] sm:$0xff]
    %v59 = vld [vmem:[#allocation6] sm:$0xff]
    %v60 = vld [vmem:[#allocation6 + $0x8] sm:$0xff]
    %v61 = vld [vmem:[#allocation6 + $0x10] sm:$0xff]
    %v62 = vld [vmem:[#allocation6 + $0x18] sm:$0xff]
    %v63 = vld [vmem:[#allocation6 + $0x20] sm:$0xff]
    %v64 = vld [vmem:[#allocation6 + $0x28] sm:$0xff]
    %v65 = vld [vmem:[#allocation6 + $0x30] sm:$0xff]
    %v66 = vld [vmem:[#allocation6 + $0x38] sm:$0xff]
    %v67 = vld [vmem:[#allocation6 + $0x40] sm:$0xff]
    %v68 = vld [vmem:[#allocation6 + $0x48] sm:$0xff]
    %v69 = vld [vmem:[#allocation6 + $0x50] sm:$0xff]
    %v70 = vld [vmem:[#allocation6 + $0x58] sm:$0xff]
    %v71 = vld [vmem:[#allocation6 + $0x60] sm:$0xff]
    %v72 = vld [vmem:[#allocation6 + $0x68] sm:$0xff]
    %v73 = vld [vmem:[#allocation6 + $0x70] sm:$0xff]
    %v74 = vld [vmem:[#allocation6 + $0x78] sm:$0xff]
    %75 = vmatpush.msra.mxu0 %v74
    %76 = vmatpush.msra.mxu0 %v73
    %77 = vmatpush.msra.mxu0 %v72
    %78 = vmatpush.msra.mxu0 %v71
    %79 = vmatpush.msra.mxu0 %v70
    %80 = vmatpush.msra.mxu0 %v69
    %81 = vmatpush.msra.mxu0 %v68
    %82 = vmatpush.msra.mxu0 %v67
    %83 = vmatpush.msra.mxu0 %v66
    %84 = vmatpush.msra.mxu0 %v65
    %85 = vmatpush.msra.mxu0 %v64
    %86 = vmatpush.msra.mxu0 %v63
    %87 = vmatpush.msra.mxu0 %v62
    %88 = vmatpush.msra.mxu0 %v61
    %89 = vmatpush.msra.mxu0 %v60
    %90 = vmatpush.msra.mxu0 %v59
    %91 = vmatmul.f32.gmra.mxu0 %v58
    %v92 = vpop.f32.mrf.mxu0
    %v93 = vadd.f32 0.0, %v92
    %94 = vdwg.mxu0
    %p95 = scmp.eq.s32.totalorder 0, 0
    // Predicated region
    $region26: #{tpu_custom_call.1} parent=1 // pred_check
      %p96 = pneg %p95
    $region27: #{tpu_custom_call.1} parent=1 // pred_check_branch
      %98 = sbr.rel (%p96) target = $region29
    $region28: #{tpu_custom_call.1} parent=1 // pred_region
      %99 = vst [vmem:[#allocation2] sm:$0xff] %v93
    $region29: #{tpu_custom_call.1} parent=1 // pred_fallthru
      _
    %p100 = scmp.ne.s32.totalorder 0, 0
    // Predicated region
    $region30: #{tpu_custom_call.1} parent=1 // pred_check
      %p101 = pneg %p100
    $region31: #{tpu_custom_call.1} parent=1 // pred_check_branch
      %103 = sbr.rel (%p101) target = $region33
    $region32: #{tpu_custom_call.1} parent=1 // pred_region
      %v104 = vld [vmem:[#allocation2] sm:$0xff]
      %v105 = vadd.f32 %v104, %v93
      %106 = vst [vmem:[#allocation2] sm:$0xff] %v105
    $region33: #{tpu_custom_call.1} parent=1 // pred_fallthru
      _
    // Predicated region
    $region34: #{tpu_custom_call.1} parent=1 // pred_check
      %p107 = pneg %p95
    $region35: #{tpu_custom_call.1} parent=1 // pred_check_branch
      %109 = sbr.rel (%p107) target = $region37
    $region36: #{tpu_custom_call.1} parent=1 // pred_region
      %v110 = vld [vmem:[#allocation8] sm:$0x3]
      %v111 = vld [vmem:[#allocation2] sm:$0xff]
      %v112 = vperm.slane %v110, 0
      %v113 = vmul.f32 %v111, %v112
      %v114 = vperm.slane %v110, 1
      %v115 = vadd.f32 %v113, %v114
      %116 = vst [vmem:[#allocation9] sm:$0xff] %v115
    $region37: #{tpu_custom_call.1} parent=1 // pred_fallthru
      _
    // Predicated region
    $region38: #{tpu_custom_call.1} parent=1 // pred_check
      _
    $region39: #{tpu_custom_call.1} parent=1 // pred_check_branch
      %118 = sbr.rel (0) target = $region41
    $region40: #{tpu_custom_call.1} parent=1 // pred_region
      %120 = vsyncadd [#allocation5], 0
      %s122 = sshll.u32 [#allocation9], 4
      %s123 = int_to_ptr.vmem [resolvable:$true] %s122
      %s124 = sshll.u32 %s3, 4
      %s125 = int_to_ptr.hbm [resolvable:$true] %s124
      %127 = dma.vmem_to_hbm [thread:$0]  %s123, 128, %s125, [#allocation5]
    $region41: #{tpu_custom_call.1} parent=1 // pred_fallthru
      _
    // Predicated region
    $region42: #{tpu_custom_call.1} parent=1 // pred_check
      _
    $region43: #{tpu_custom_call.1} parent=1 // pred_check_branch
      %129 = sbr.rel (0) target = $region45
    $region44: #{tpu_custom_call.1} parent=1 // pred_region
      %131 = dma.done [#allocation5], 128
    $region45: #{tpu_custom_call.1} parent=1 // pred_fallthru
      _
    %132 = vsyncpa [#allocation4], 1
    %133 = vsyncpa [#allocation7], 1
    %134 = vsyncpa [#allocation5], 1

</llo_original>
